<compile_context>
chip_gen: v7x
topology: tpu7x:2x2x1
jax: 0.10.0
libtpu: 0.0.40
codegen_flags: <defaults>
</compile_context>

<pallas_src>
import jax
import jax.numpy as jnp
from jax.experimental import pallas as pl
from jax.experimental.pallas import tpu as pltpu


def _round_up(x, m):
    return ((x + m - 1) // m) * m


def tactile_kernel(x_ref, k_ref, w_ref, b_ref, o_ref):
    # x_ref: [TB, 2F] (= cat(x1, x2))     k_ref: [TB, K]
    # w_ref: [2F*K, O] with w[j*2F + f, o] = W[o, f*K + j]   (j-major rows)
    # b_ref: [1, O]                       o_ref: [TB, O]
    x = x_ref[...]
    kk = k_ref[...]
    twoF = x.shape[1]
    K = kk.shape[1]

    acc = jnp.zeros((x.shape[0], o_ref.shape[1]), jnp.float32)
    # K is small and static -> fully unrolled.  Each step: one VPU broadcast
    # scale by a k column + one MXU accumulate against a static (sublane-aligned)
    # slice of the resident weight.
    # TODO(synk): a single full-depth dot ([tb, 2F*K] @ [2F*K, O]) after building
    # a lane-dense j-major LHS would cut MXU issues further, but requires
    # sub-128-lane concatenation in-kernel; kept as K dots for guaranteed lowering
    # (the kernel is HBM-bound, so this is not on the critical path).
    for j in range(K):
        kj = kk[:, j:j + 1]                                        # [TB, 1]
        wj = w_ref[j * twoF:(j + 1) * twoF, :]                     # [2F, O]
        acc += jnp.dot(x * kj, wj, preferred_element_type=jnp.float32)

    o_ref[...] = (acc + b_ref[...]).astype(o_ref.dtype)


def _choose_tile_b(B, tile_b):
    """Pick the batch tile: large (amortize ~0.35us/step + hit HBM roofline),
    >=2 grid steps when the batch allows it (v7x shards parallel axes over its
    2 TensorCores), and <~10% padding waste."""
    B8 = _round_up(B, 8)
    if B8 <= 256:
        return B8                                     # tiny batch: one tile
    if B8 <= tile_b:
        return _round_up(pl.cdiv(B8, 2), 128)         # split across 2 cores
    tb = tile_b
    while tb > 256 and (_round_up(B, tb) - B) * 10 > B:
        tb //= 2                                      # cap padding waste ~10%
    return tb


def tactile_meas_model(x1, x2, k, W, b, *, tile_b=2048):
    """Forward pass of TactileMeasModel.

    x1, x2: [B, F]; k: [B, K]; W: torch-layout weight [O, 2F*K]; b: [O] or [1, O].
    """
    B, F = x1.shape
    _, K = k.shape
    O, IN = W.shape
    assert IN == 2 * F * K
    twoF = 2 * F

    # One-time relayouts in XLA (outside the kernel):
    #   xcat = cat(x1, x2)  and  Wc[j*2F + f, o] = W[o, f*K + j]
    # so the kernel never concatenates / reshapes along the lane axis.
    xcat = jnp.concatenate([x1, x2], axis=1)                              # [B, 2F]
    Wc = jnp.transpose(W.reshape(O, twoF, K), (2, 1, 0)).reshape(twoF * K, O)
    b = b.reshape(1, O)

    tb = _choose_tile_b(B, tile_b)
    Bp = _round_up(B, tb)
    if Bp != B:
        pad = ((0, Bp - B), (0, 0))
        xcat = jnp.pad(xcat, pad)
        k = jnp.pad(k, pad)

    # VMEM budget: double-buffered I/O tiles + resident weight/bias + headroom.
    need = (2 * tb * (twoF + K + O) + 2 * (twoF * K * O + O) + tb * twoF) * 4
    vmem_limit = int(min(max(int(1.5 * need) + (2 << 20), 32 << 20), 56 << 20))

    flops = 2 * Bp * (twoF * K) * O + Bp * twoF * K
    bytes_accessed = (Bp * (twoF + K + O) + twoF * K * O + O) * 4

    out = pl.pallas_call(
        tactile_kernel,
        out_shape=jax.ShapeDtypeStruct((Bp, O), x1.dtype),
        grid_spec=pl.GridSpec(
            grid=(Bp // tb,),
            in_specs=[
                pl.BlockSpec((tb, twoF), lambda i: (i, 0)),       # xcat tile
                pl.BlockSpec((tb, K), lambda i: (i, 0)),          # k tile
                pl.BlockSpec((twoF * K, O), lambda i: (0, 0)),    # resident weight
                pl.BlockSpec((1, O), lambda i: (0, 0)),           # resident bias
            ],
            out_specs=pl.BlockSpec((tb, O), lambda i: (i, 0)),
        ),
        compiler_params=pltpu.CompilerParams(
            dimension_semantics=("parallel",),
            vmem_limit_bytes=vmem_limit,
        ),
        cost_estimate=pl.CostEstimate(
            flops=flops, transcendentals=0, bytes_accessed=bytes_accessed),
        # TODO(synk): at production 2F*K / O sizes on v7x (64 MiB VMEM),
        # single-buffer the resident weight (pipeline_mode=pl.Buffered(1)) or add
        # an O-axis grid dimension.
        # TODO(synk): if numerics allow, carry xcat/k/out as bf16 in HBM and
        # upcast in-kernel (keep the f32 accumulator) to halve HBM traffic.
    )(xcat, k, Wc, b)
    return out[:B]


if __name__ == "__main__":
    # Small shapes consistent with the module: per-input features F=16,
    # k width K=4 => input_size = 2*F*K = 128, output_size = 32, batch = 8.
    B, F, K, O = 8, 16, 4, 32
    IN = 2 * F * K

    key = jax.random.PRNGKey(0)
    k1, k2, k3, kw, kb = jax.random.split(key, 5)

    x1 = jax.random.normal(k1, (B, F), dtype=jnp.float32)
    x2 = jax.random.normal(k2, (B, F), dtype=jnp.float32)
    kk = jax.random.normal(k3, (B, K), dtype=jnp.float32)

    # Deterministic Linear init (PyTorch-style uniform(-1/sqrt(in), 1/sqrt(in))).
    bound = 1.0 / (IN ** 0.5)
    W = jax.random.uniform(kw, (O, IN), dtype=jnp.float32, minval=-bound, maxval=bound)
    bias = jax.random.uniform(kb, (O,), dtype=jnp.float32, minval=-bound, maxval=bound)

    out = tactile_meas_model(x1, x2, kk, W, bias)
    out = jax.block_until_ready(out)

    # Pure-JAX reference (mirrors the torch ops exactly).
    x_cat = jnp.concatenate([x1, x2], axis=1)
    z_ref = (x_cat[:, :, None] * kk[:, None, :]).reshape(B, -1)
    ref = z_ref @ W.T + bias.reshape(1, O)

    assert out.shape == (B, O)
    assert jnp.allclose(out, ref, atol=1e-5, rtol=1e-5)

    print("KERNEL_OK")
</pallas_src>

<mosaic_0001>
module attributes {stable_mosaic.version = 11 : i64} {
  func.func @tactile_kernel(%arg0: i32, %arg1: memref<8x32xf32, #tpu.memory_space<vmem>>, %arg2: memref<8x4xf32, #tpu.memory_space<vmem>>, %arg3: memref<128x32xf32, #tpu.memory_space<vmem>>, %arg4: memref<1x32xf32, #tpu.memory_space<vmem>>, %arg5: memref<8x32xf32, #tpu.memory_space<vmem>>) attributes {dimension_semantics = [#tpu.dimension_semantics<parallel>], iteration_bounds = array<i64: 1>, scalar_prefetch = 0 : i64, scratch_operands = 0 : i64, tpu.core_type = #tpu.core_type<tc>, window_params = [{transform_indices = @transform_0, window_bounds = array<i64: 8, 32>}, {transform_indices = @transform_1, window_bounds = array<i64: 8, 4>}, {pipeline_mode = #tpu.pipeline_mode<synchronous>, transform_indices = @transform_2, window_bounds = array<i64: 128, 32>}, {pipeline_mode = #tpu.pipeline_mode<synchronous>, transform_indices = @transform_3, window_bounds = array<i64: 1, 32>}, {transform_indices = @transform_4, window_bounds = array<i64: 8, 32>}]} {
    %c0 = arith.constant 0 : index
    %c0_0 = arith.constant 0 : index
    %0 = vector.load %arg1[%c0, %c0_0] : memref<8x32xf32, #tpu.memory_space<vmem>>, vector<8x32xf32>
    %c0_1 = arith.constant 0 : index
    %c0_2 = arith.constant 0 : index
    %1 = vector.load %arg2[%c0_1, %c0_2] : memref<8x4xf32, #tpu.memory_space<vmem>>, vector<8x4xf32>
    %cst = arith.constant 0.000000e+00 : f32
    %2 = vector.broadcast %cst : f32 to vector<8x32xf32>
    %3 = vector.extract_strided_slice %1 {offsets = [0, 0], sizes = [8, 1], strides = [1, 1]} : vector<8x4xf32> to vector<8x1xf32>
    %c0_3 = arith.constant 0 : index
    %c0_4 = arith.constant 0 : index
    %4 = vector.load %arg3[%c0_3, %c0_4] : memref<128x32xf32, #tpu.memory_space<vmem>>, vector<32x32xf32>
    %5 = vector.broadcast %3 : vector<8x1xf32> to vector<8x32xf32>
    %6 = arith.mulf %0, %5 : vector<8x32xf32>
    %cst_5 = arith.constant dense<0.000000e+00> : vector<8x32xf32>
    %7 = tpu.matmul %6, %4, %cst_5 {dimension_numbers = #tpu.dot_dimension_numbers<[1], [0], [0], [1], [0, 0, 1, 1], [], []>} : vector<8x32xf32>, vector<32x32xf32>, vector<8x32xf32> -> vector<8x32xf32>
    %8 = arith.addf %2, %7 : vector<8x32xf32>
    %9 = vector.extract_strided_slice %1 {offsets = [0, 1], sizes = [8, 1], strides = [1, 1]} : vector<8x4xf32> to vector<8x1xf32>
    %c32 = arith.constant 32 : index
    %c0_6 = arith.constant 0 : index
    %10 = vector.load %arg3[%c32, %c0_6] : memref<128x32xf32, #tpu.memory_space<vmem>>, vector<32x32xf32>
    %11 = vector.broadcast %9 : vector<8x1xf32> to vector<8x32xf32>
    %12 = arith.mulf %0, %11 : vector<8x32xf32>
    %cst_7 = arith.constant dense<0.000000e+00> : vector<8x32xf32>
    %13 = tpu.matmul %12, %10, %cst_7 {dimension_numbers = #tpu.dot_dimension_numbers<[1], [0], [0], [1], [0, 0, 1, 1], [], []>} : vector<8x32xf32>, vector<32x32xf32>, vector<8x32xf32> -> vector<8x32xf32>
    %14 = arith.addf %8, %13 : vector<8x32xf32>
    %15 = vector.extract_strided_slice %1 {offsets = [0, 2], sizes = [8, 1], strides = [1, 1]} : vector<8x4xf32> to vector<8x1xf32>
    %c64 = arith.constant 64 : index
    %c0_8 = arith.constant 0 : index
    %16 = vector.load %arg3[%c64, %c0_8] : memref<128x32xf32, #tpu.memory_space<vmem>>, vector<32x32xf32>
    %17 = vector.broadcast %15 : vector<8x1xf32> to vector<8x32xf32>
    %18 = arith.mulf %0, %17 : vector<8x32xf32>
    %cst_9 = arith.constant dense<0.000000e+00> : vector<8x32xf32>
    %19 = tpu.matmul %18, %16, %cst_9 {dimension_numbers = #tpu.dot_dimension_numbers<[1], [0], [0], [1], [0, 0, 1, 1], [], []>} : vector<8x32xf32>, vector<32x32xf32>, vector<8x32xf32> -> vector<8x32xf32>
    %20 = arith.addf %14, %19 : vector<8x32xf32>
    %21 = vector.extract_strided_slice %1 {offsets = [0, 3], sizes = [8, 1], strides = [1, 1]} : vector<8x4xf32> to vector<8x1xf32>
    %c96 = arith.constant 96 : index
    %c0_10 = arith.constant 0 : index
    %22 = vector.load %arg3[%c96, %c0_10] : memref<128x32xf32, #tpu.memory_space<vmem>>, vector<32x32xf32>
    %23 = vector.broadcast %21 : vector<8x1xf32> to vector<8x32xf32>
    %24 = arith.mulf %0, %23 : vector<8x32xf32>
    %cst_11 = arith.constant dense<0.000000e+00> : vector<8x32xf32>
    %25 = tpu.matmul %24, %22, %cst_11 {dimension_numbers = #tpu.dot_dimension_numbers<[1], [0], [0], [1], [0, 0, 1, 1], [], []>} : vector<8x32xf32>, vector<32x32xf32>, vector<8x32xf32> -> vector<8x32xf32>
    %26 = arith.addf %20, %25 : vector<8x32xf32>
    %c0_12 = arith.constant 0 : index
    %c0_13 = arith.constant 0 : index
    %27 = vector.load %arg4[%c0_12, %c0_13] : memref<1x32xf32, #tpu.memory_space<vmem>>, vector<1x32xf32>
    %28 = vector.broadcast %27 : vector<1x32xf32> to vector<8x32xf32>
    %29 = arith.addf %26, %28 : vector<8x32xf32>
    %c0_14 = arith.constant 0 : index
    %c0_15 = arith.constant 0 : index
    %30 = vector.load %arg5[%c0_14, %c0_15] : memref<8x32xf32, #tpu.memory_space<vmem>>, vector<8x32xf32>
    tpu.vector_store %arg5[%c0_14, %c0_15], %29 {strides = array<i32>} : memref<8x32xf32, #tpu.memory_space<vmem>>, vector<8x32xf32>,
    return
  }
  func.func @transform_0(%arg0: i32) -> (i32, i32) {
    %c0_i32 = arith.constant 0 : i32
    %c0_i32_0 = arith.constant 0 : i32
    return %arg0, %c0_i32 : i32, i32
  }
  func.func @transform_1(%arg0: i32) -> (i32, i32) {
    %c0_i32 = arith.constant 0 : i32
    %c0_i32_0 = arith.constant 0 : i32
    return %arg0, %c0_i32 : i32, i32
  }
  func.func @transform_2(%arg0: i32) -> (i32, i32) {
    %c0_i32 = arith.constant 0 : i32
    %c0_i32_0 = arith.constant 0 : i32
    %c0_i32_1 = arith.constant 0 : i32
    return %c0_i32, %c0_i32_0 : i32, i32
  }
  func.func @transform_3(%arg0: i32) -> (i32, i32) {
    %c0_i32 = arith.constant 0 : i32
    %c0_i32_0 = arith.constant 0 : i32
    %c0_i32_1 = arith.constant 0 : i32
    return %c0_i32, %c0_i32_0 : i32, i32
  }
  func.func @transform_4(%arg0: i32) -> (i32, i32) {
    %c0_i32 = arith.constant 0 : i32
    %c0_i32_0 = arith.constant 0 : i32
    return %arg0, %c0_i32 : i32, i32
  }
}

</mosaic_0001>

<llo_original>
// kernel: tpu_custom_call.1
$region0: #{tpu_custom_call.1}
  #allocation0 [shape = 'u32[]', space=smem, size = 0x4, offset = 0x4, fixed_abs, tag = 'smem constant byte address 0x4 - core index']
  #allocation1 [shape = 'u32[144,128]{1,0:T(1,128)}', space=vmem, size = 0x12000, scoped, tag = 'internal scratch']
  %s0 = inlined_call_operand.vmem [shape: f32[8,32], index: 0, kind: input, shape index: {}]
  %s1 = inlined_call_operand.vmem [shape: f32[8,4], index: 1, kind: input, shape index: {}]
  %s2 = inlined_call_operand.vmem [shape: f32[128,32], index: 2, kind: input, shape index: {}]
  %s3 = inlined_call_operand.vmem [shape: f32[1,32], index: 3, kind: input, shape index: {}]
  %s4 = inlined_call_operand.hbm [shape: f32[8,32], index: 4, kind: output, shape index: {}]
  %s5 = sld [smem:[#allocation0]]
  $region26: #{tpu_custom_call.1} parent=0
    _
  %s7 = ssub.s32 1, %s5
  %s8 = scalar_select 0, %s7, %s5
  $region1: #{tpu_custom_call.1} parent=0
    #allocation2 [shape = 'u8[4096]{0}', space=vmem, size = 0x1000, scoped, tag = 'output window, operand 0, single buffered']
    #allocation3 [shape = 's32[1]{0}', space=sflag, size = 0x4, scoped, tag = 'scoped memory for tpu_custom_call.1']
    %9 = vsyncpa [#allocation3], 0
    // Predicated region
    $region2: #{tpu_custom_call.1} parent=1 // pred_check
      _
    $region3: #{tpu_custom_call.1} parent=1 // pred_check_branch
      %11 = sbr.rel (0) target = $region5
    $region4: #{tpu_custom_call.1} parent=1 // pred_region
      _
    $region5: #{tpu_custom_call.1} parent=1 // pred_fallthru
      _
    // Predicated region
    $region6: #{tpu_custom_call.1} parent=1 // pred_check
      _
    $region7: #{tpu_custom_call.1} parent=1 // pred_check_branch
      %13 = sbr.rel (0) target = $region9
    $region8: #{tpu_custom_call.1} parent=1 // pred_region
      _
    $region9: #{tpu_custom_call.1} parent=1 // pred_fallthru
      _
    // Predicated region
    $region10: #{tpu_custom_call.1} parent=1 // pred_check
      _
    $region11: #{tpu_custom_call.1} parent=1 // pred_check_branch
      %15 = sbr.rel (0) target = $region13
    $region12: #{tpu_custom_call.1} parent=1 // pred_region
      _
    $region13: #{tpu_custom_call.1} parent=1 // pred_fallthru
      _
    // Predicated region
    $region14: #{tpu_custom_call.1} parent=1 // pred_check
      _
    $region15: #{tpu_custom_call.1} parent=1 // pred_check_branch
      %17 = sbr.rel (0) target = $region17
    $region16: #{tpu_custom_call.1} parent=1 // pred_region
      _
    $region17: #{tpu_custom_call.1} parent=1 // pred_fallthru
      _
    %v18 = vld [vmem:[%s0] sm:$0xff]
    %v19 = vld [vmem:[%s1] sm:$0xff]
    %v20 = vld [vmem:[%s2] sm:$0xff]
    %v21 = vld [vmem:[%s2 + $0x8] sm:$0xff]
    %v22 = vld [vmem:[%s2 + $0x10] sm:$0xff]
    %v23 = vld [vmem:[%s2 + $0x18] sm:$0xff]
    %25 = vset.pattern.permute.xlu0 0
    %26 = vperm.xlu0 %25, %v19
    %v27 = vpop.permute.xlu0 %26
    %v29 = vmul.f32 %v18, %v27
    %v30 = vld [vmem:[%s2 + $0x20] sm:$0xff]
    %v31 = vld [vmem:[%s2 + $0x28] sm:$0xff]
    %v32 = vld [vmem:[%s2 + $0x30] sm:$0xff]
    %v33 = vld [vmem:[%s2 + $0x38] sm:$0xff]
    %34 = vset.pattern.permute.xlu0 1
    %35 = vperm.xlu0 %34, %v19
    %v36 = vpop.permute.xlu0 %35
    %v38 = vmul.f32 %v18, %v36
    %vm39 = vcmask 261120
    %v41 = vsel %vm39, %v38, 0
    %43 = vmatprep.subr.mxu0 0.0
    %44 = vmatpush1.msra.mxu0 %v30
    %45 = vmatprep.subr.mxu0 0.0
    %46 = vmatpush1.msra.mxu0 %v31
    %47 = vmatprep.subr.mxu0 0.0
    %48 = vmatpush1.msra.mxu0 %v32
    %49 = vmatprep.subr.mxu0 0.0
    %50 = vmatpush1.msra.mxu0 %v33
    %51 = vmatprep.subr.mxu0 0.0
    %52 = vmatpush1.msra.mxu0 0.0
    %53 = vmatprep.subr.mxu0 0.0
    %54 = vmatpush1.msra.mxu0 0.0
    %55 = vmatprep.subr.mxu0 0.0
    %56 = vmatpush1.msra.mxu0 0.0
    %57 = vmatprep.subr.mxu0 0.0
    %58 = vmatpush1.msra.mxu0 0.0
    %59 = vmatprep.subr.mxu0 0.0
    %60 = vmatpush1.msra.mxu0 0.0
    %61 = vmatprep.subr.mxu0 0.0
    %62 = vmatpush1.msra.mxu0 0.0
    %63 = vmatprep.subr.mxu0 0.0
    %64 = vmatpush1.msra.mxu0 0.0
    %65 = vmatprep.subr.mxu0 0.0
    %66 = vmatpush1.msra.mxu0 0.0
    %67 = vmatprep.subr.mxu0 0.0
    %68 = vmatpush1.msra.mxu0 0.0
    %69 = vmatprep.subr.mxu0 0.0
    %70 = vmatpush1.msra.mxu0 0.0
    %71 = vmatprep.subr.mxu0 0.0
    %72 = vmatpush1.msra.mxu0 0.0
    %73 = vmatprep.subr.mxu0 0.0
    %74 = vmatpush1.msra.mxu0 0.0
    %75 = vmatprep.subr.mxu0 0.0
    %76 = vmatpush1.msra.mxu0 0.0
    %77 = vmatprep.subr.mxu0 0.0
    %78 = vmatpush1.msra.mxu0 0.0
    %79 = vmatprep.subr.mxu0 0.0
    %80 = vmatpush1.msra.mxu0 0.0
    %81 = vmatprep.subr.mxu0 0.0
    %82 = vmatpush1.msra.mxu0 0.0
    %83 = vmatprep.subr.mxu0 0.0
    %84 = vmatpush1.msra.mxu0 0.0
    %85 = vmatprep.subr.mxu0 0.0
    %86 = vmatpush1.msra.mxu0 0.0
    %87 = vmatprep.subr.mxu0 0.0
    %88 = vmatpush1.msra.mxu0 0.0
    %89 = vmatprep.subr.mxu0 0.0
    %90 = vmatpush1.msra.mxu0 0.0
    %91 = vmatprep.subr.mxu0 0.0
    %92 = vmatpush1.msra.mxu0 0.0
    %93 = vmatprep.subr.mxu0 0.0
    %94 = vmatpush1.msra.mxu0 0.0
    %95 = vmatprep.subr.mxu0 0.0
    %96 = vmatpush1.msra.mxu0 0.0
    %97 = vmatprep.subr.mxu0 0.0
    %98 = vmatpush1.msra.mxu0 0.0
    %99 = vmatprep.subr.mxu0 0.0
    %100 = vmatpush1.msra.mxu0 0.0
    %101 = vmatprep.subr.mxu0 0.0
    %102 = vmatpush1.msra.mxu0 0.0
    %103 = vmatprep.subr.mxu0 0.0
    %104 = vmatpush1.msra.mxu0 0.0
    %105 = vmatprep.subr.mxu0 0.0
    %106 = vmatpush1.msra.mxu0 0.0
    %107 = vmatprep.mubr.f32.mxu0 0.0
    %108 = vmatmul.mubr.f32.gmra.mrb[0].mxu0 %v41
    %v109 = vpop.f32.mrb[0].mxu0
    %v110 = vadd.f32 0.0, %v109
    %v111 = vpop.f32.mrb[0].mxu0
    %112 = vdwg.mxu0
    %v114 = vsel %vm39, %v29, 0
    %116 = vmatprep.subr.mxu0 0.0
    %117 = vmatpush1.msra.mxu0 %v20
    %118 = vmatprep.subr.mxu0 0.0
    %119 = vmatpush1.msra.mxu0 %v21
    %120 = vmatprep.subr.mxu0 0.0
    %121 = vmatpush1.msra.mxu0 %v22
    %122 = vmatprep.subr.mxu0 0.0
    %123 = vmatpush1.msra.mxu0 %v23
    %124 = vmatprep.subr.mxu0 0.0
    %125 = vmatpush1.msra.mxu0 0.0
    %126 = vmatprep.subr.mxu0 0.0
    %127 = vmatpush1.msra.mxu0 0.0
    %128 = vmatprep.subr.mxu0 0.0
    %129 = vmatpush1.msra.mxu0 0.0
    %130 = vmatprep.subr.mxu0 0.0
    %131 = vmatpush1.msra.mxu0 0.0
    %132 = vmatprep.subr.mxu0 0.0
    %133 = vmatpush1.msra.mxu0 0.0
    %134 = vmatprep.subr.mxu0 0.0
    %135 = vmatpush1.msra.mxu0 0.0
    %136 = vmatprep.subr.mxu0 0.0
    %137 = vmatpush1.msra.mxu0 0.0
    %138 = vmatprep.subr.mxu0 0.0
    %139 = vmatpush1.msra.mxu0 0.0
    %140 = vmatprep.subr.mxu0 0.0
    %141 = vmatpush1.msra.mxu0 0.0
    %142 = vmatprep.subr.mxu0 0.0
    %143 = vmatpush1.msra.mxu0 0.0
    %144 = vmatprep.subr.mxu0 0.0
    %145 = vmatpush1.msra.mxu0 0.0
    %146 = vmatprep.subr.mxu0 0.0
    %147 = vmatpush1.msra.mxu0 0.0
    %148 = vmatprep.subr.mxu0 0.0
    %149 = vmatpush1.msra.mxu0 0.0
    %150 = vmatprep.subr.mxu0 0.0
    %151 = vmatpush1.msra.mxu0 0.0
    %152 = vmatprep.subr.mxu0 0.0
    %153 = vmatpush1.msra.mxu0 0.0
    %154 = vmatprep.subr.mxu0 0.0
    %155 = vmatpush1.msra.mxu0 0.0
    %156 = vmatprep.subr.mxu0 0.0
    %157 = vmatpush1.msra.mxu0 0.0
    %158 = vmatprep.subr.mxu0 0.0
    %159 = vmatpush1.msra.mxu0 0.0
    %160 = vmatprep.subr.mxu0 0.0
    %161 = vmatpush1.msra.mxu0 0.0
    %162 = vmatprep.subr.mxu0 0.0
    %163 = vmatpush1.msra.mxu0 0.0
    %164 = vmatprep.subr.mxu0 0.0
    %165 = vmatpush1.msra.mxu0 0.0
    %166 = vmatprep.subr.mxu0 0.0
    %167 = vmatpush1.msra.mxu0 0.0
    %168 = vmatprep.subr.mxu0 0.0
    %169 = vmatpush1.msra.mxu0 0.0
    %170 = vmatprep.subr.mxu0 0.0
    %171 = vmatpush1.msra.mxu0 0.0
    %172 = vmatprep.subr.mxu0 0.0
    %173 = vmatpush1.msra.mxu0 0.0
    %174 = vmatprep.subr.mxu0 0.0
    %175 = vmatpush1.msra.mxu0 0.0
    %176 = vmatprep.subr.mxu0 0.0
    %177 = vmatpush1.msra.mxu0 0.0
    %178 = vmatprep.subr.mxu0 0.0
    %179 = vmatpush1.msra.mxu0 0.0
    %180 = vmatprep.mubr.f32.mxu0 0.0
    %181 = vmatmul.mubr.f32.gmra.mrb[0].mxu0 %v114
    %v182 = vpop.f32.mrb[0].mxu0
    %v183 = vadd.f32 %v110, %v182
    %v184 = vpop.f32.mrb[0].mxu0
    %185 = vdwg.mxu0
    %v186 = vld [vmem:[%s2 + $0x40] sm:$0xff]
    %v187 = vld [vmem:[%s2 + $0x48] sm:$0xff]
    %v188 = vld [vmem:[%s2 + $0x50] sm:$0xff]
    %v189 = vld [vmem:[%s2 + $0x58] sm:$0xff]
    %190 = vset.pattern.permute.xlu0 2
    %191 = vperm.xlu0 %190, %v19
    %v192 = vpop.permute.xlu0 %191
    %v194 = vmul.f32 %v18, %v192
    %v196 = vsel %vm39, %v194, 0
    %198 = vmatprep.subr.mxu0 0.0
    %199 = vmatpush1.msra.mxu0 %v186
    %200 = vmatprep.subr.mxu0 0.0
    %201 = vmatpush1.msra.mxu0 %v187
    %202 = vmatprep.subr.mxu0 0.0
    %203 = vmatpush1.msra.mxu0 %v188
    %204 = vmatprep.subr.mxu0 0.0
    %205 = vmatpush1.msra.mxu0 %v189
    %206 = vmatprep.subr.mxu0 0.0
    %207 = vmatpush1.msra.mxu0 0.0
    %208 = vmatprep.subr.mxu0 0.0
    %209 = vmatpush1.msra.mxu0 0.0
    %210 = vmatprep.subr.mxu0 0.0
    %211 = vmatpush1.msra.mxu0 0.0
    %212 = vmatprep.subr.mxu0 0.0
    %213 = vmatpush1.msra.mxu0 0.0
    %214 = vmatprep.subr.mxu0 0.0
    %215 = vmatpush1.msra.mxu0 0.0
    %216 = vmatprep.subr.mxu0 0.0
    %217 = vmatpush1.msra.mxu0 0.0
    %218 = vmatprep.subr.mxu0 0.0
    %219 = vmatpush1.msra.mxu0 0.0
    %220 = vmatprep.subr.mxu0 0.0
    %221 = vmatpush1.msra.mxu0 0.0
    %222 = vmatprep.subr.mxu0 0.0
    %223 = vmatpush1.msra.mxu0 0.0
    %224 = vmatprep.subr.mxu0 0.0
    %225 = vmatpush1.msra.mxu0 0.0
    %226 = vmatprep.subr.mxu0 0.0
    %227 = vmatpush1.msra.mxu0 0.0
    %228 = vmatprep.subr.mxu0 0.0
    %229 = vmatpush1.msra.mxu0 0.0
    %230 = vmatprep.subr.mxu0 0.0
    %231 = vmatpush1.msra.mxu0 0.0
    %232 = vmatprep.subr.mxu0 0.0
    %233 = vmatpush1.msra.mxu0 0.0
    %234 = vmatprep.subr.mxu0 0.0
    %235 = vmatpush1.msra.mxu0 0.0
    %236 = vmatprep.subr.mxu0 0.0
    %237 = vmatpush1.msra.mxu0 0.0
    %238 = vmatprep.subr.mxu0 0.0
    %239 = vmatpush1.msra.mxu0 0.0
    %240 = vmatprep.subr.mxu0 0.0
    %241 = vmatpush1.msra.mxu0 0.0
    %242 = vmatprep.subr.mxu0 0.0
    %243 = vmatpush1.msra.mxu0 0.0
    %244 = vmatprep.subr.mxu0 0.0
    %245 = vmatpush1.msra.mxu0 0.0
    %246 = vmatprep.subr.mxu0 0.0
    %247 = vmatpush1.msra.mxu0 0.0
    %248 = vmatprep.subr.mxu0 0.0
    %249 = vmatpush1.msra.mxu0 0.0
    %250 = vmatprep.subr.mxu0 0.0
    %251 = vmatpush1.msra.mxu0 0.0
    %252 = vmatprep.subr.mxu0 0.0
    %253 = vmatpush1.msra.mxu0 0.0
    %254 = vmatprep.subr.mxu0 0.0
    %255 = vmatpush1.msra.mxu0 0.0
    %256 = vmatprep.subr.mxu0 0.0
    %257 = vmatpush1.msra.mxu0 0.0
    %258 = vmatprep.subr.mxu0 0.0
    %259 = vmatpush1.msra.mxu0 0.0
    %260 = vmatprep.subr.mxu0 0.0
    %261 = vmatpush1.msra.mxu0 0.0
    %262 = vmatprep.mubr.f32.mxu0 0.0
    %263 = vmatmul.mubr.f32.gmra.mrb[0].mxu0 %v196
    %v264 = vpop.f32.mrb[0].mxu0
    %v265 = vadd.f32 0.0, %v264
    %v266 = vpop.f32.mrb[0].mxu0
    %267 = vdwg.mxu0
    %v268 = vadd.f32 %v183, %v265
    %v269 = vld [vmem:[%s2 + $0x60] sm:$0xff]
    %v270 = vld [vmem:[%s2 + $0x68] sm:$0xff]
    %v271 = vld [vmem:[%s2 + $0x70] sm:$0xff]
    %v272 = vld [vmem:[%s2 + $0x78] sm:$0xff]
    %273 = vset.pattern.permute.xlu0 3
    %274 = vperm.xlu0 %273, %v19
    %v275 = vpop.permute.xlu0 %274
    %v277 = vmul.f32 %v18, %v275
    %v279 = vsel %vm39, %v277, 0
    %281 = vmatprep.subr.mxu0 0.0
    %282 = vmatpush1.msra.mxu0 %v269
    %283 = vmatprep.subr.mxu0 0.0
    %284 = vmatpush1.msra.mxu0 %v270
    %285 = vmatprep.subr.mxu0 0.0
    %286 = vmatpush1.msra.mxu0 %v271
    %287 = vmatprep.subr.mxu0 0.0
    %288 = vmatpush1.msra.mxu0 %v272
    %289 = vmatprep.subr.mxu0 0.0
    %290 = vmatpush1.msra.mxu0 0.0
    %291 = vmatprep.subr.mxu0 0.0
    %292 = vmatpush1.msra.mxu0 0.0
    %293 = vmatprep.subr.mxu0 0.0
    %294 = vmatpush1.msra.mxu0 0.0
    %295 = vmatprep.subr.mxu0 0.0
    %296 = vmatpush1.msra.mxu0 0.0
    %297 = vmatprep.subr.mxu0 0.0
    %298 = vmatpush1.msra.mxu0 0.0
    %299 = vmatprep.subr.mxu0 0.0
    %300 = vmatpush1.msra.mxu0 0.0
    %301 = vmatprep.subr.mxu0 0.0
    %302 = vmatpush1.msra.mxu0 0.0
    %303 = vmatprep.subr.mxu0 0.0
    %304 = vmatpush1.msra.mxu0 0.0
    %305 = vmatprep.subr.mxu0 0.0
    %306 = vmatpush1.msra.mxu0 0.0
    %307 = vmatprep.subr.mxu0 0.0
    %308 = vmatpush1.msra.mxu0 0.0
    %309 = vmatprep.subr.mxu0 0.0
    %310 = vmatpush1.msra.mxu0 0.0
    %311 = vmatprep.subr.mxu0 0.0
    %312 = vmatpush1.msra.mxu0 0.0
    %313 = vmatprep.subr.mxu0 0.0
    %314 = vmatpush1.msra.mxu0 0.0
    %315 = vmatprep.subr.mxu0 0.0
    %316 = vmatpush1.msra.mxu0 0.0
    %317 = vmatprep.subr.mxu0 0.0
    %318 = vmatpush1.msra.mxu0 0.0
    %319 = vmatprep.subr.mxu0 0.0
    %320 = vmatpush1.msra.mxu0 0.0
    %321 = vmatprep.subr.mxu0 0.0
    %322 = vmatpush1.msra.mxu0 0.0
    %323 = vmatprep.subr.mxu0 0.0
    %324 = vmatpush1.msra.mxu0 0.0
    %325 = vmatprep.subr.mxu0 0.0
    %326 = vmatpush1.msra.mxu0 0.0
    %327 = vmatprep.subr.mxu0 0.0
    %328 = vmatpush1.msra.mxu0 0.0
    %329 = vmatprep.subr.mxu0 0.0
    %330 = vmatpush1.msra.mxu0 0.0
    %331 = vmatprep.subr.mxu0 0.0
    %332 = vmatpush1.msra.mxu0 0.0
    %333 = vmatprep.subr.mxu0 0.0
    %334 = vmatpush1.msra.mxu0 0.0
    %335 = vmatprep.subr.mxu0 0.0
    %336 = vmatpush1.msra.mxu0 0.0
    %337 = vmatprep.subr.mxu0 0.0
    %338 = vmatpush1.msra.mxu0 0.0
    %339 = vmatprep.subr.mxu0 0.0
    %340 = vmatpush1.msra.mxu0 0.0
    %341 = vmatprep.subr.mxu0 0.0
    %342 = vmatpush1.msra.mxu0 0.0
    %343 = vmatprep.subr.mxu0 0.0
    %344 = vmatpush1.msra.mxu0 0.0
    %345 = vmatprep.mubr.f32.mxu0 0.0
    %346 = vmatmul.mubr.f32.gmra.mrb[0].mxu0 %v279
    %v347 = vpop.f32.mrb[0].mxu0
    %v348 = vadd.f32 0.0, %v347
    %v349 = vpop.f32.mrb[0].mxu0
    %350 = vdwg.mxu0
    %v351 = vadd.f32 %v268, %v348
    %v352 = vld [vmem:[%s3] sm:$0x1]
    %v354 = vlaneseq
    %v355 = vshrl.u32 %v354, 7
    %v356 = vsub.s32 0, %v355
    %v357 = vrot.slane %v352, %v356
    %v359 = vadd.f32 %v351, %v357
    %360 = vst.msk [vmem:[#allocation2] sm:$0xff] %vm39, %v359
    // Predicated region
    $region18: #{tpu_custom_call.1} parent=1 // pred_check
      _
    $region19: #{tpu_custom_call.1} parent=1 // pred_check_branch
      %362 = sbr.rel (0) target = $region21
    $region20: #{tpu_custom_call.1} parent=1 // pred_region
      %s364 = ssub.s32 128, 128
      %365 = vsyncadd [#allocation3], %s364
      %s367 = sshll.u32 [#allocation2], 4
      %s368 = int_to_ptr.vmem [resolvable:$true] %s367
      %370 = dma.vmem_to_hbm [thread:$0]  %s368, 128, %s4, [#allocation3]
    $region21: #{tpu_custom_call.1} parent=1 // pred_fallthru
      _
    // Predicated region
    $region22: #{tpu_custom_call.1} parent=1 // pred_check
      _
    $region23: #{tpu_custom_call.1} parent=1 // pred_check_branch
      %372 = sbr.rel (0) target = $region25
    $region24: #{tpu_custom_call.1} parent=1 // pred_region
      %373 = dma.done [#allocation3], 128
    $region25: #{tpu_custom_call.1} parent=1 // pred_fallthru
      _
    %374 = vsyncpa [#allocation3], 1

</llo_original>
